<compile_context>
chip_gen: v6e
topology: v6e:2x2x1
jax: 0.10.0
libtpu: 0.0.40
codegen_flags: <defaults>
</compile_context>

<pallas_src>
import jax
import jax.numpy as jnp
from jax import lax
from jax.experimental import pallas as pl
from jax.experimental.pallas import tpu as pltpu

MU = (1.0, 0.9, 0.7, 0.5, 0.3, 0.1, -0.1, -0.3, -0.5, -0.7, -0.9)
INV_2SIG2 = 1.0 / (2.0 * 0.1 * 0.1)                       # all 11 sigmas are 0.1 -> 50.0
_KNRM_A = tuple(float(m) * 2.0 * INV_2SIG2 for m in MU)   # mu / sigma^2 = 100 * mu


def _round_up(x, m):
    return ((x + m - 1) // m) * m


def _tpu_vmem_capacity():
    try:
        return int(pltpu.get_tpu_info().vmem_capacity_bytes)
    except Exception:
        return None


_VMEM_CAP = _tpu_vmem_capacity()
# generation-aware scoped-VMEM limit (None -> keep the compiler default)
_VMEM_LIMIT = min(_VMEM_CAP // 2, 128 << 20) if _VMEM_CAP else None   # 64 MiB v5e/v6e, 32 MiB v7x
_BLOCK_BUDGET = (_VMEM_LIMIT or (32 << 20)) // 2                      # budget for pipelined blocks
_BN_CAP = 64 if (_VMEM_CAP is not None and _VMEM_CAP <= (80 << 20)) else 128


def _cparams():
    if _VMEM_LIMIT is not None:
        return pltpu.CompilerParams(dimension_semantics=("parallel",),
                                    vmem_limit_bytes=_VMEM_LIMIT)
    return pltpu.CompilerParams(dimension_semantics=("parallel",))


def _pick_bn(n, per_seq_bytes):
    """Sequences per grid step: multiple of 8, fits the VMEM block budget, <= cap."""
    bn = max(8, min(_BN_CAP, (_BLOCK_BUDGET // max(per_seq_bytes, 1)) // 8 * 8))
    if n <= bn:
        bn = _round_up(n, 8)
    return bn, _round_up(n, bn)


# ----------------------- conv ("ck" sampling context) -----------------------


def conv_ck_kernel(x_ref, w_ref, b_ref, o_ref):
    # x_ref: (TM, D) bf16 -- TM = bn*(L+2) flattened (sequence, token) rows; every
    #        sequence carries 2 trailing zero rows (padding_idx embeddings), so the
    #        taps never mix neighbouring sequences (wrapped rows land on pad rows).
    # w_ref: (3, D, D) bf16 conv taps (tap, d_in, d_out);  b_ref: (1, D) f32
    x = x_ref[...]
    acc0 = jnp.dot(x, w_ref[0], preferred_element_type=jnp.float32)
    acc1 = jnp.dot(x, w_ref[1], preferred_element_type=jnp.float32)
    acc2 = jnp.dot(x, w_ref[2], preferred_element_type=jnp.float32)
    # out[t] = x[t]@W0 + x[t+1]@W1 + x[t+2]@W2  -> shift the tap partials in VMEM
    acc = (acc0
           + jnp.concatenate([acc1[1:], acc1[:1]], axis=0)
           + jnp.concatenate([acc2[2:], acc2[:2]], axis=0))
    y = jnp.maximum(acc + b_ref[...], 0.0)                           # bias + ReLU
    ss = jnp.sum(y * y, axis=-1, keepdims=True)
    # F.normalize(p=2): y / max(||y||, 1e-12) == y * rsqrt(max(||y||^2, 1e-24))  (EUP)
    o_ref[...] = (y * lax.rsqrt(jnp.maximum(ss, 1e-24))).astype(o_ref.dtype)


def conv_ck(x_padded, w_taps, b):
    """ConstantPad1d((0,2)) + Conv1d(k=3) + ReLU + L2-normalize, channels-last.

    x_padded: (N, Lp, D) bf16, Lp = L + 2, last 2 rows of every sequence are zeros.
    Returns (N, Lp, D) bf16 (the 2 pad rows carry junk and are masked downstream).
    No window tensor is ever written to HBM.
    """
    N, Lp, D = x_padded.shape
    per_seq = Lp * D * (2 * 2 + 2 * 2 + 12)            # in/out double-buffered + f32 temps
    bn, n_pad = _pick_bn(N, per_seq)
    x_padded = jnp.pad(x_padded, ((0, n_pad - N), (0, 0), (0, 0)))
    flat = x_padded.reshape(n_pad * Lp, D)             # contiguous reshape (free)
    tm = bn * Lp                                       # rows per grid step (multiple of 8)
    out = pl.pallas_call(
        conv_ck_kernel,
        out_shape=jax.ShapeDtypeStruct((n_pad * Lp, D), jnp.bfloat16),
        grid=(n_pad // bn,),
        in_specs=[pl.BlockSpec((tm, D), lambda n: (n, 0)),
                  # TODO(synk): on v7x consider pipeline_mode=pl.Buffered(1) for this
                  # resident weight block (avoids double-buffering it at D=768).
                  pl.BlockSpec((3, D, D), lambda n: (0, 0, 0)),
                  pl.BlockSpec((1, D), lambda n: (0, 0))],
        out_specs=pl.BlockSpec((tm, D), lambda n: (n, 0)),
        compiler_params=_cparams(),
    )(flat, w_taps, b)
    return out.reshape(n_pad, Lp, D)[:N]


# ----------------------------- KNRM chunk scoring ----------------------------


def knrm_score_kernel(q_ref, d_ref, dm_ref, qm_ref, alpha_ref, bw_ref, bb_ref, o_ref):
    q = q_ref[...]                                   # (BN, QL, D) bf16, L2-normalized
    d = d_ref[...]                                   # (BN, DL, D) bf16, L2-normalized
    qm = qm_ref[...]                                 # (BN, QL)    f32 query-token mask
    # batched cosine matrix on the MXU (bf16 operands, f32 accumulation)
    cos = jnp.einsum('bqd,bkd->bqk', q, d, preferred_element_type=jnp.float32)
    # fold the doc-token mask ONCE: sentinel cosine -> every bin's exp underflows to 0
    cos = jnp.where(dm_ref[...] > 0.0, cos, -100.0)  # dm (BN,1,DL) broadcasts over q
    c2 = cos * cos * (-INV_2SIG2)                    # hoisted out of the 11-bin loop
    acc = jnp.zeros(qm.shape, jnp.float32)           # (BN, QL)
    for k in range(11):                              # unrolled bins (EUP-bound exp)
        # exp(-(c-mu)^2/(2s^2)) = exp(c2 + (mu/s^2)*c) * exp(-mu^2/(2s^2)); the
        # constant factor is folded into alpha_eff on the host.
        act = jnp.exp(c2 + cos * _KNRM_A[k])         # (BN, QL, DL)
        sd = jnp.sum(act, axis=-1)                   # doc-sum (BN, QL)
        acc = acc + jnp.log(jnp.maximum(sd * alpha_ref[k], 1e-4)) * bw_ref[k]
    acc = acc * qm                                   # query-token mask (applied once)
    # query-sum as a (1,QL)x(QL,BN) matmul -> lane-dense (1, BN) score row
    ones_q = jnp.ones((1, acc.shape[1]), jnp.float32)
    score = lax.dot_general(ones_q, acc, (((1,), (1,)), ((), ())),
                            preferred_element_type=jnp.float32)
    o_ref[0] = (score + bb_ref[0]).astype(o_ref.dtype)


def knrm_scores(q_ctx, d_ctx, d_mask3, q_mask, alpha_eff, bw, bb):
    N, QL, D = q_ctx.shape
    DL = d_ctx.shape[1]
    per_seq = 2 * ((QL + DL) * D * 2 + (QL + DL) * 4) + QL * DL * 12
    bn, n_pad = _pick_bn(N, per_seq)
    pad = n_pad - N
    q_ctx = jnp.pad(q_ctx, ((0, pad), (0, 0), (0, 0)))
    d_ctx = jnp.pad(d_ctx, ((0, pad), (0, 0), (0, 0)))
    d_mask3 = jnp.pad(d_mask3, ((0, pad), (0, 0), (0, 0)))
    q_mask = jnp.pad(q_mask, ((0, pad), (0, 0)))
    nblk = n_pad // bn
    out = pl.pallas_call(
        knrm_score_kernel,
        out_shape=jax.ShapeDtypeStruct((nblk, 1, bn), jnp.float32),
        grid=(nblk,),
        in_specs=[pl.BlockSpec((bn, QL, D), lambda n: (n, 0, 0)),
                  pl.BlockSpec((bn, DL, D), lambda n: (n, 0, 0)),
                  pl.BlockSpec((bn, 1, DL), lambda n: (n, 0, 0)),
                  pl.BlockSpec((bn, QL), lambda n: (n, 0)),
                  pl.BlockSpec(memory_space=pltpu.MemorySpace.SMEM),   # alpha_eff (11,)
                  pl.BlockSpec(memory_space=pltpu.MemorySpace.SMEM),   # bin_w (11,)
                  pl.BlockSpec(memory_space=pltpu.MemorySpace.SMEM)],  # bin_b (1,)
        out_specs=pl.BlockSpec((1, 1, bn), lambda n: (n, 0, 0)),
        compiler_params=_cparams(),
    )(q_ctx, d_ctx, d_mask3, q_mask, alpha_eff, bw, bb)
    return out.reshape(-1)[:N]


# ----------------------- "BERT" chunk scoring (stub) -------------------------


def bert_stub_kernel(eq_ref, ed_ref, mq_ref, md_ref, wp_ref, bp_ref, wc_ref, bc_ref, o_ref):
    # TODO(synk): the pretrained transformer (self.bert_model) has no clean Pallas
    # equivalent; it is replaced by a deterministic masked-mean + tanh pooler stub.
    eq = eq_ref[...]                                  # (BN, QL, D) bf16 query embeddings
    ed = ed_ref[...]                                  # (BN, DL, D) bf16 chunk embeddings
    mq = mq_ref[...]                                  # (BN, 1, QL) f32
    md = md_ref[...]                                  # (BN, 1, DL) f32
    # masked token-sums over [query ; chunk] as batched matvecs on the MXU
    sq = jnp.einsum('bqs,bsd->bqd', mq.astype(jnp.bfloat16), eq,
                    preferred_element_type=jnp.float32)               # (BN, 1, D)
    sd = jnp.einsum('bqs,bsd->bqd', md.astype(jnp.bfloat16), ed,
                    preferred_element_type=jnp.float32)               # (BN, 1, D)
    cnt = jnp.maximum(jnp.sum(mq, axis=-1, keepdims=True)
                      + jnp.sum(md, axis=-1, keepdims=True), 1.0)     # (BN, 1, 1)
    pooled = jnp.sum((sq + sd) / cnt, axis=1)                         # (BN, D)
    h = jnp.tanh(jnp.dot(pooled.astype(jnp.bfloat16), wp_ref[...],
                         preferred_element_type=jnp.float32) + bp_ref[...])
    # classification layer as (1,D)x(D,BN) -> lane-dense (1, BN) score row
    s = lax.dot_general(wc_ref[...], h, (((1,), (1,)), ((), ())),
                        preferred_element_type=jnp.float32)
    o_ref[0] = (s + bc_ref[0]).astype(o_ref.dtype)


def bert_stub_scores(q_emb, d_emb, q_mask3, d_mask3, wp, bp, wc, bc):
    N, QL, D = q_emb.shape
    DL = d_emb.shape[1]
    per_seq = 2 * ((QL + DL) * D * 2 + (QL + DL) * 4)
    bn, n_pad = _pick_bn(N, per_seq)
    pad = n_pad - N
    q_emb = jnp.pad(q_emb, ((0, pad), (0, 0), (0, 0)))
    d_emb = jnp.pad(d_emb, ((0, pad), (0, 0), (0, 0)))
    q_mask3 = jnp.pad(q_mask3, ((0, pad), (0, 0), (0, 0)))
    d_mask3 = jnp.pad(d_mask3, ((0, pad), (0, 0), (0, 0)))
    nblk = n_pad // bn
    out = pl.pallas_call(
        bert_stub_kernel,
        out_shape=jax.ShapeDtypeStruct((nblk, 1, bn), jnp.float32),
        grid=(nblk,),
        in_specs=[pl.BlockSpec((bn, QL, D), lambda n: (n, 0, 0)),
                  pl.BlockSpec((bn, DL, D), lambda n: (n, 0, 0)),
                  pl.BlockSpec((bn, 1, QL), lambda n: (n, 0, 0)),
                  pl.BlockSpec((bn, 1, DL), lambda n: (n, 0, 0)),
                  pl.BlockSpec((D, D), lambda n: (0, 0)),
                  pl.BlockSpec((1, D), lambda n: (0, 0)),
                  pl.BlockSpec((1, D), lambda n: (0, 0)),
                  pl.BlockSpec(memory_space=pltpu.MemorySpace.SMEM)],  # cls bias (1,)
        out_specs=pl.BlockSpec((1, 1, bn), lambda n: (n, 0, 0)),
        compiler_params=_cparams(),
    )(q_emb, d_emb, q_mask3, d_mask3, wp, bp, wc, bc)
    return out.reshape(-1)[:N]


# ------------------------------- forward (glue) ------------------------------


def bert_patch_title_forward(params, query_ids, doc_ids, title_ids, *,
                             chunk_size=8, overlap=2, sample_n=1,
                             top_k_chunks=3, padding_idx=0):
    B, QL = query_ids.shape
    TLf = title_ids.shape[1]
    ext = chunk_size + 2 * overlap

    # --- document chunking (matches torch pad + unfold + title prepend) ---
    doc = doc_ids[:, 1:]
    orig_len = doc.shape[1]
    if orig_len > overlap:
        needed = ext - (orig_len % chunk_size - overlap)
    else:
        needed = ext - overlap - orig_len
    doc = jnp.pad(doc, ((0, 0), (overlap, needed)), constant_values=padding_idx)
    n_chunks = (doc.shape[1] - ext) // chunk_size + 1
    chunks = jnp.stack([doc[:, i * chunk_size:i * chunk_size + ext]
                        for i in range(n_chunks)], axis=1)                    # (B, C, ext)
    title = title_ids[:, 1:]
    chunked_ids = jnp.concatenate(
        [jnp.broadcast_to(title[:, None, :], (B, n_chunks, title.shape[1])), chunks], axis=-1)
    DL = chunked_ids.shape[-1]
    chunked_unrolled = chunked_ids.reshape(-1, DL)                            # (N, DL)

    # NOTE: torch packs rows with boolean indexing (dynamic shape); here we keep
    # static shapes and mask instead — scattered-back results are identical.
    packed_indices = jnp.any(
        chunked_unrolled[:, TLf + overlap:-overlap] != padding_idx, axis=-1)  # (N,)

    packed_query_ids = jnp.broadcast_to(query_ids[:, None, :], (B, n_chunks, QL)).reshape(-1, QL)

    # ids right-padded by 2 so the CNN taps can be built inside the kernel
    # (padding_idx embeds to an exact zero row); masks derived from the padded ids.
    q_ids_p = jnp.pad(packed_query_ids, ((0, 0), (0, 2)), constant_values=padding_idx)
    d_ids_p = jnp.pad(chunked_unrolled, ((0, 0), (0, 2)), constant_values=padding_idx)
    q_mask_p = (q_ids_p != padding_idx).astype(jnp.float32)                   # (N, QL+2)
    d_mask_p = (d_ids_p != padding_idx).astype(jnp.float32)                   # (N, DL+2)
    q_mask3 = q_mask_p[:, None, :]
    d_mask3 = d_mask_p[:, None, :]

    # --- shared embedding gathers (bf16, reused by the CNN and the BERT stub) ---
    # TODO(synk): bert_model.embeddings stub = token embedding table only
    # (no position embeddings / LayerNorm of the pretrained model).
    emb_bf = params["emb"].astype(jnp.bfloat16)
    q_emb_p = emb_bf[q_ids_p]                                                 # (N, QL+2, D)
    d_emb_p = emb_bf[d_ids_p]                                                 # (N, DL+2, D)

    # --- sampling scorer ("ck" context CNN + KNRM kernel pooling) ---
    # PyTorch Conv1d weight layout is (out, in, k) -> tap-major (k, d_in, d_out).
    w_taps = jnp.transpose(params["conv_w"], (2, 1, 0)).astype(jnp.bfloat16)
    q_ctx = conv_ck(q_emb_p, w_taps, params["conv_b"])                        # (N, QL+2, D) bf16
    d_ctx = conv_ck(d_emb_p, w_taps, params["conv_b"])                        # (N, DL+2, D) bf16

    mu = jnp.asarray(MU, jnp.float32)
    alpha_eff = params["alpha"] * jnp.exp(-(mu * mu) * INV_2SIG2)             # folded exp constant
    samp_scores = knrm_scores(q_ctx, d_ctx, d_mask3, q_mask_p,
                              alpha_eff, params["bin_w"], params["bin_b"])    # (N,)

    sampling_scores = jnp.where(packed_indices, samp_scores, 0.0).reshape(B, n_chunks)
    sampling_scores_orig = sampling_scores
    sampling_masked = jnp.where(sampling_scores == 0.0, -9000.0, sampling_scores)
    sort_idx = jnp.argsort(-sampling_masked, axis=-1)
    sampled_indices = (sort_idx + jnp.arange(0, B * n_chunks, n_chunks)[:, None])[:, :sample_n]
    sampled_mask = jnp.zeros((B * n_chunks,), jnp.float32).at[sampled_indices.reshape(-1)].set(1.0)

    # --- "BERT" chunk scores + classification (reuses q_emb_p / d_emb_p gathers) ---
    bert_scores = bert_stub_scores(q_emb_p, d_emb_p, q_mask3, d_mask3,
                                   params["pool_w"].astype(jnp.bfloat16), params["pool_b"],
                                   params["cls_w"], params["cls_b"])          # (N,)

    scores_per_doc = jnp.where(packed_indices, bert_scores, 0.0).reshape(B, n_chunks)
    scores_per_doc_orig = scores_per_doc
    scores_per_doc = scores_per_doc * sampled_mask.reshape(B, n_chunks)

    # --- final top-k scoring ---
    if n_chunks < top_k_chunks:
        scores_per_doc = jnp.pad(scores_per_doc, ((0, 0), (0, top_k_chunks - n_chunks)))
    scores_per_doc = jnp.where(scores_per_doc == 0.0, -9000.0, scores_per_doc)
    score_sorted = -jnp.sort(-scores_per_doc, axis=-1)                        # descending
    score_sorted = jnp.where(score_sorted <= -8900.0, 0.0, score_sorted)
    score = jnp.sum(score_sorted[:, :top_k_chunks] * params["top_k_scoring"], axis=1)

    # TODO(synk): LambdaLoss / KLDiv / MSE / gumbel training losses are not computed here.
    return score, scores_per_doc_orig, sampling_scores_orig


# ------------------------------------ main -----------------------------------

if __name__ == "__main__":
    key = jax.random.PRNGKey(0)
    ks = jax.random.split(key, 12)

    B, QLf, TLf, DOCf = 2, 6, 5, 21
    V, D = 30, 32
    chunk_size, overlap = 8, 2
    sample_n, top_k_chunks = 1, 3

    query_ids = jax.random.randint(ks[0], (B, QLf), 1, V)
    query_ids = query_ids.at[1, -1].set(0)            # some query padding
    doc_ids = jax.random.randint(ks[1], (B, DOCf), 1, V)
    doc_ids = doc_ids.at[1, 13:].set(0)               # padded doc tail -> empty last chunk
    title_ids = jax.random.randint(ks[2], (B, TLf), 1, V)

    emb_table = jax.random.normal(ks[3], (V, D), jnp.float32) * 0.1
    emb_table = emb_table.at[0].set(0.0)              # nn.Embedding(padding_idx=0) -> zero row
                                                      # (the in-kernel conv taps rely on this)
    params = {
        "emb": emb_table,
        # PyTorch Conv1d weight layout: (out_channels, in_channels, kernel_size)
        "conv_w": jax.random.normal(ks[4], (D, D, 3), jnp.float32) * 0.05,
        "conv_b": jax.random.normal(ks[5], (1, D), jnp.float32) * 0.01,
        "alpha": jnp.ones((11,), jnp.float32),                             # kernel_alpha_scaler
        "bin_w": jax.random.uniform(ks[6], (11,), dtype=jnp.float32,
                                    minval=-0.01, maxval=0.01),            # sampling_binweights
        "bin_b": jnp.zeros((1,), jnp.float32),
        "pool_w": jax.random.normal(ks[7], (D, D), jnp.float32) * 0.05,    # BERT-stub pooler
        "pool_b": jnp.zeros((1, D), jnp.float32),
        "cls_w": jax.random.normal(ks[8], (1, D), jnp.float32) * 0.05,     # _classification_layer
        "cls_b": jnp.zeros((1,), jnp.float32),
        "top_k_scoring": jnp.ones((1, top_k_chunks), jnp.float32),
    }

    score, bert_scores_per_doc, sampling_scores_per_doc = bert_patch_title_forward(
        params, query_ids, doc_ids, title_ids,
        chunk_size=chunk_size, overlap=overlap,
        sample_n=sample_n, top_k_chunks=top_k_chunks)

    jax.block_until_ready((score, bert_scores_per_doc, sampling_scores_per_doc))
    assert score.shape == (B,)
    assert bert_scores_per_doc.shape[0] == B
    assert sampling_scores_per_doc.shape[0] == B
    print("KERNEL_OK")
</pallas_src>

<mosaic_0001>
module attributes {stable_mosaic.version = 11 : i64} {
  func.func @conv_ck_kernel(%arg0: i32, %arg1: memref<64x32xbf16, #tpu.memory_space<vmem>>, %arg2: memref<3x32x32xbf16, #tpu.memory_space<vmem>>, %arg3: memref<1x32xf32, #tpu.memory_space<vmem>>, %arg4: memref<64x32xbf16, #tpu.memory_space<vmem>>) attributes {dimension_semantics = [#tpu.dimension_semantics<parallel>], iteration_bounds = array<i64: 1>, scalar_prefetch = 0 : i64, scratch_operands = 0 : i64, tpu.core_type = #tpu.core_type<tc>, window_params = [{transform_indices = @transform_0, window_bounds = array<i64: 64, 32>}, {pipeline_mode = #tpu.pipeline_mode<synchronous>, transform_indices = @transform_1, window_bounds = array<i64: 3, 32, 32>}, {pipeline_mode = #tpu.pipeline_mode<synchronous>, transform_indices = @transform_2, window_bounds = array<i64: 1, 32>}, {transform_indices = @transform_3, window_bounds = array<i64: 64, 32>}]} {
    %c0 = arith.constant 0 : index
    %c0_0 = arith.constant 0 : index
    %0 = vector.load %arg1[%c0, %c0_0] : memref<64x32xbf16, #tpu.memory_space<vmem>>, vector<64x32xbf16>
    %c0_1 = arith.constant 0 : index
    %c0_2 = arith.constant 0 : index
    %c0_3 = arith.constant 0 : index
    %1 = vector.load %arg2[%c0_1, %c0_2, %c0_3] : memref<3x32x32xbf16, #tpu.memory_space<vmem>>, vector<1x32x32xbf16>
    %2 = vector.shape_cast %1 : vector<1x32x32xbf16> to vector<32x32xbf16>
    %cst = arith.constant dense<0.000000e+00> : vector<64x32xf32>
    %3 = tpu.matmul %0, %2, %cst {dimension_numbers = #tpu.dot_dimension_numbers<[1], [0], [0], [1], [0, 0, 1, 1], [], []>} : vector<64x32xbf16>, vector<32x32xbf16>, vector<64x32xf32> -> vector<64x32xf32>
    %c1 = arith.constant 1 : index
    %c0_4 = arith.constant 0 : index
    %c0_5 = arith.constant 0 : index
    %4 = vector.load %arg2[%c1, %c0_4, %c0_5] : memref<3x32x32xbf16, #tpu.memory_space<vmem>>, vector<1x32x32xbf16>
    %5 = vector.shape_cast %4 : vector<1x32x32xbf16> to vector<32x32xbf16>
    %cst_6 = arith.constant dense<0.000000e+00> : vector<64x32xf32>
    %6 = tpu.matmul %0, %5, %cst_6 {dimension_numbers = #tpu.dot_dimension_numbers<[1], [0], [0], [1], [0, 0, 1, 1], [], []>} : vector<64x32xbf16>, vector<32x32xbf16>, vector<64x32xf32> -> vector<64x32xf32>
    %c2 = arith.constant 2 : index
    %c0_7 = arith.constant 0 : index
    %c0_8 = arith.constant 0 : index
    %7 = vector.load %arg2[%c2, %c0_7, %c0_8] : memref<3x32x32xbf16, #tpu.memory_space<vmem>>, vector<1x32x32xbf16>
    %8 = vector.shape_cast %7 : vector<1x32x32xbf16> to vector<32x32xbf16>
    %cst_9 = arith.constant dense<0.000000e+00> : vector<64x32xf32>
    %9 = tpu.matmul %0, %8, %cst_9 {dimension_numbers = #tpu.dot_dimension_numbers<[1], [0], [0], [1], [0, 0, 1, 1], [], []>} : vector<64x32xbf16>, vector<32x32xbf16>, vector<64x32xf32> -> vector<64x32xf32>
    %10 = vector.extract_strided_slice %6 {offsets = [1, 0], sizes = [63, 32], strides = [1, 1]} : vector<64x32xf32> to vector<63x32xf32>
    %11 = vector.extract_strided_slice %6 {offsets = [0, 0], sizes = [1, 32], strides = [1, 1]} : vector<64x32xf32> to vector<1x32xf32>
    %12 = tpu.concatenate %10, %11 in 0 : vector<63x32xf32>, vector<1x32xf32> -> vector<64x32xf32>
    %13 = arith.addf %3, %12 : vector<64x32xf32>
    %14 = vector.extract_strided_slice %9 {offsets = [2, 0], sizes = [62, 32], strides = [1, 1]} : vector<64x32xf32> to vector<62x32xf32>
    %15 = vector.extract_strided_slice %9 {offsets = [0, 0], sizes = [2, 32], strides = [1, 1]} : vector<64x32xf32> to vector<2x32xf32>
    %16 = tpu.concatenate %14, %15 in 0 : vector<62x32xf32>, vector<2x32xf32> -> vector<64x32xf32>
    %17 = arith.addf %13, %16 : vector<64x32xf32>
    %c0_10 = arith.constant 0 : index
    %c0_11 = arith.constant 0 : index
    %18 = vector.load %arg3[%c0_10, %c0_11] : memref<1x32xf32, #tpu.memory_space<vmem>>, vector<1x32xf32>
    %19 = vector.broadcast %18 : vector<1x32xf32> to vector<64x32xf32>
    %20 = arith.addf %17, %19 : vector<64x32xf32>
    %cst_12 = arith.constant 0.000000e+00 : f32
    %21 = vector.broadcast %cst_12 : f32 to vector<64x32xf32>
    %22 = arith.maximumf %20, %21 : vector<64x32xf32>
    %23 = arith.mulf %22, %22 : vector<64x32xf32>
    %cst_13 = arith.constant dense<0.000000e+00> : vector<64xf32>
    %24 = vector.multi_reduction <add>, %23, %cst_13 [1] : vector<64x32xf32> to vector<64xf32>
    %25 = vector.shape_cast %24 : vector<64xf32> to vector<64x1xf32>
    %cst_14 = arith.constant 1.000000e-24 : f32
    %26 = vector.broadcast %cst_14 : f32 to vector<64x1xf32>
    %27 = arith.maximumf %25, %26 : vector<64x1xf32>
    %28 = math.rsqrt %27 : vector<64x1xf32>
    %29 = vector.broadcast %28 : vector<64x1xf32> to vector<64x32xf32>
    %30 = arith.mulf %22, %29 : vector<64x32xf32>
    %31 = arith.truncf %30 : vector<64x32xf32> to vector<64x32xbf16>
    %c0_15 = arith.constant 0 : index
    %c0_16 = arith.constant 0 : index
    %32 = vector.load %arg4[%c0_15, %c0_16] : memref<64x32xbf16, #tpu.memory_space<vmem>>, vector<64x32xbf16>
    tpu.vector_store %arg4[%c0_15, %c0_16], %31 {strides = array<i32>} : memref<64x32xbf16, #tpu.memory_space<vmem>>, vector<64x32xbf16>,
    return
  }
  func.func @transform_0(%arg0: i32) -> (i32, i32) {
    %c0_i32 = arith.constant 0 : i32
    %c0_i32_0 = arith.constant 0 : i32
    return %arg0, %c0_i32 : i32, i32
  }
  func.func @transform_1(%arg0: i32) -> (i32, i32, i32) {
    %c0_i32 = arith.constant 0 : i32
    %c0_i32_0 = arith.constant 0 : i32
    %c0_i32_1 = arith.constant 0 : i32
    %c0_i32_2 = arith.constant 0 : i32
    return %c0_i32, %c0_i32_0, %c0_i32_1 : i32, i32, i32
  }
  func.func @transform_2(%arg0: i32) -> (i32, i32) {
    %c0_i32 = arith.constant 0 : i32
    %c0_i32_0 = arith.constant 0 : i32
    %c0_i32_1 = arith.constant 0 : i32
    return %c0_i32, %c0_i32_0 : i32, i32
  }
  func.func @transform_3(%arg0: i32) -> (i32, i32) {
    %c0_i32 = arith.constant 0 : i32
    %c0_i32_0 = arith.constant 0 : i32
    return %arg0, %c0_i32 : i32, i32
  }
}

</mosaic_0001>

<llo_original>
// kernel: tpu_custom_call.1
$region0: #{tpu_custom_call.1}
  #allocation0 [shape = 'u32[]', space=smem, size = 0x4, offset = 0x4, fixed_abs, tag = 'smem constant byte address 0x4 - core index']
  #allocation1 [shape = 'u32[144,128]{1,0:T(1,128)}', space=vmem, size = 0x12000, scoped, tag = 'internal scratch']
  %s0 = inlined_call_operand.vmem [shape: bf16[64,32], index: 0, kind: input, shape index: {}]
  %s1 = inlined_call_operand.vmem [shape: bf16[3,32,32], index: 1, kind: input, shape index: {}]
  %s2 = inlined_call_operand.vmem [shape: f32[1,32], index: 2, kind: input, shape index: {}]
  %s3 = inlined_call_operand.vmem [shape: bf16[64,32], index: 3, kind: output, shape index: {}]
  %s4 = sld [smem:[#allocation0]]
  $region22: #{tpu_custom_call.1} parent=0
    _
  %s6 = ssub.s32 1, %s4
  %s7 = scalar_select 0, %s6, %s4
  // Predicated region
  $region2: #{tpu_custom_call.1} parent=0 // pred_check
    _
  $region3: #{tpu_custom_call.1} parent=0 // pred_check_branch
    %9 = sbr.rel (0) target = $region5
  $region4: #{tpu_custom_call.1} parent=0 // pred_region
    _
  $region5: #{tpu_custom_call.1} parent=0 // pred_fallthru
    _
  // Predicated region
  $region6: #{tpu_custom_call.1} parent=0 // pred_check
    _
  $region7: #{tpu_custom_call.1} parent=0 // pred_check_branch
    %11 = sbr.rel (0) target = $region9
  $region8: #{tpu_custom_call.1} parent=0 // pred_region
    _
  $region9: #{tpu_custom_call.1} parent=0 // pred_fallthru
    _
  // Predicated region
  $region10: #{tpu_custom_call.1} parent=0 // pred_check
    _
  $region11: #{tpu_custom_call.1} parent=0 // pred_check_branch
    %13 = sbr.rel (0) target = $region13
  $region12: #{tpu_custom_call.1} parent=0 // pred_region
    _
  $region13: #{tpu_custom_call.1} parent=0 // pred_fallthru
    _
  %v15 = vld [vmem:[%s0] sm:$0xf]
  %v16 = vld [vmem:[%s0 + $0x4] sm:$0xf]
  %v17 = vld [vmem:[%s0 + $0x8] sm:$0xf]
  %v18 = vld [vmem:[%s0 + $0xc] sm:$0xf]
  %v19 = vld [vmem:[%s0 + $0x10] sm:$0xf]
  %v20 = vld [vmem:[%s0 + $0x14] sm:$0xf]
  %v21 = vld [vmem:[%s0 + $0x18] sm:$0xf]
  %v22 = vld [vmem:[%s0 + $0x1c] sm:$0xf]
  %v23 = vld [vmem:[%s1] sm:$0xf]
  %v24 = vld [vmem:[%s1 + $0x4] sm:$0xf]
  %v25 = vld [vmem:[%s1 + $0x8] sm:$0xf]
  %v26 = vld [vmem:[%s1 + $0xc] sm:$0xf]
  %s27 = scalar_lea.vmem %s1, 16
  %v28 = vld [vmem:[%s27] sm:$0xf]
  %v29 = vld [vmem:[%s27 + $0x4] sm:$0xf]
  %v30 = vld [vmem:[%s27 + $0x8] sm:$0xf]
  %v31 = vld [vmem:[%s27 + $0xc] sm:$0xf]
  %v40 = vunpack.c.l.b16 %v15
  %v41 = vunpack.c.l.b16 %v16
  %v42 = vunpack.c.l.b16 %v17
  %v43 = vunpack.c.l.b16 %v18
  %v44 = vunpack.c.l.b16 %v19
  %v45 = vunpack.c.l.b16 %v20
  %v46 = vunpack.c.l.b16 %v21
  %v47 = vunpack.c.l.b16 %v22
  %v48 = vpack.c.b16 %v41, %v40
  %v49 = vpack.c.b16 %v43, %v42
  %v50 = vpack.c.b16 %v45, %v44
  %v51 = vpack.c.b16 %v47, %v46
  %v56 = vunpack.c.l.b16 %v28
  %v57 = vunpack.c.l.b16 %v29
  %v58 = vunpack.c.l.b16 %v30
  %v59 = vunpack.c.l.b16 %v31
  %v60 = vpack.c.b16 %v57, %v56
  %v61 = vpack.c.b16 %v59, %v58
  %vm64 = vcmask 261120
  %v66 = vsel %vm64, %v48, 0
  %v69 = vsel %vm64, %v49, 0
  %v72 = vsel %vm64, %v50, 0
  %v75 = vsel %vm64, %v51, 0
  %77 = vmatprep.subr.bf16.mxu0 0
  %78 = vmatpush1.bf16.msra.mxu0 0
  %79 = vmatprep.subr.bf16.mxu0 0
  %80 = vmatpush1.bf16.msra.mxu0 0
  %81 = vmatprep.subr.bf16.mxu0 0
  %82 = vmatpush1.bf16.msra.mxu0 0
  %83 = vmatprep.subr.bf16.mxu0 0
  %84 = vmatpush1.bf16.msra.mxu0 0
  %85 = vmatprep.subr.bf16.mxu0 0
  %86 = vmatpush1.bf16.msra.mxu0 0
  %87 = vmatprep.subr.bf16.mxu0 0
  %88 = vmatpush1.bf16.msra.mxu0 0
  %89 = vmatprep.subr.bf16.mxu0 0
  %90 = vmatpush1.bf16.msra.mxu0 %v61
  %91 = vmatprep.subr.bf16.mxu0 0
  %92 = vmatpush1.bf16.msra.mxu0 %v60
  %93 = vmatprep.subr.bf16.mxu0 0
  %94 = vmatpush2.bf16.msra.mxu0 0
  %95 = vmatprep.subr.bf16.mxu0 0
  %96 = vmatpush2.bf16.msra.mxu0 0
  %97 = vmatprep.subr.bf16.mxu0 0
  %98 = vmatpush2.bf16.msra.mxu0 0
  %99 = vmatprep.subr.bf16.mxu0 0
  %100 = vmatpush2.bf16.msra.mxu0 0
  %101 = vmatprep.subr.bf16.mxu0 0
  %102 = vmatpush2.bf16.msra.mxu0 0
  %103 = vmatprep.subr.bf16.mxu0 0
  %104 = vmatpush2.bf16.msra.mxu0 0
  %105 = vmatprep.subr.bf16.mxu0 0
  %106 = vmatpush2.bf16.msra.mxu0 0
  %107 = vmatprep.subr.bf16.mxu0 0
  %108 = vmatpush2.bf16.msra.mxu0 0
  %109 = vmatprep.mubr.bf16.mxu0 0
  %110 = vmatmul.mubr.bf16.gmra.mxu0 %v66
  %v111 = vpop.f32.mrf.mxu0
  %v112 = vadd.f32 0.0, %v111
  %v113 = vpop.f32.mrf.mxu0
  %v114 = vpop.f32.mrf.mxu0
  %v115 = vadd.f32 0.0, %v114
  %v116 = vpop.f32.mrf.mxu0
  %117 = vmatprep.mubr.bf16.mxu0 0
  %118 = vmatmul.mubr.bf16.gmra.mxu0 %v69
  %v119 = vpop.f32.mrf.mxu0
  %v120 = vadd.f32 0.0, %v119
  %v121 = vpop.f32.mrf.mxu0
  %v122 = vpop.f32.mrf.mxu0
  %v123 = vadd.f32 0.0, %v122
  %v124 = vpop.f32.mrf.mxu0
  %125 = vmatprep.mubr.bf16.mxu0 0
  %126 = vmatmul.mubr.bf16.gmra.mxu0 %v72
  %v127 = vpop.f32.mrf.mxu0
  %v128 = vadd.f32 0.0, %v127
  %v129 = vpop.f32.mrf.mxu0
  %v130 = vpop.f32.mrf.mxu0
  %v131 = vadd.f32 0.0, %v130
  %v132 = vpop.f32.mrf.mxu0
  %133 = vmatprep.mubr.bf16.mxu0 0
  %134 = vmatmul.mubr.bf16.gmra.mxu0 %v75
  %v135 = vpop.f32.mrf.mxu0
  %v136 = vadd.f32 0.0, %v135
  %v137 = vpop.f32.mrf.mxu0
  %v138 = vpop.f32.mrf.mxu0
  %v139 = vadd.f32 0.0, %v138
  %v140 = vpop.f32.mrf.mxu0
  %141 = vdwg.mxu0
  %s142 = scalar_lea.vmem %s1, 32
  %v143 = vld [vmem:[%s142] sm:$0xf]
  %v144 = vld [vmem:[%s142 + $0x4] sm:$0xf]
  %v145 = vld [vmem:[%s142 + $0x8] sm:$0xf]
  %v146 = vld [vmem:[%s142 + $0xc] sm:$0xf]
  %v151 = vunpack.c.l.b16 %v143
  %v152 = vunpack.c.l.b16 %v144
  %v153 = vunpack.c.l.b16 %v145
  %v154 = vunpack.c.l.b16 %v146
  %v155 = vpack.c.b16 %v152, %v151
  %v156 = vpack.c.b16 %v154, %v153
  %159 = vmatprep.subr.bf16.mxu0 0
  %160 = vmatpush1.bf16.msra.mxu0 0
  %161 = vmatprep.subr.bf16.mxu0 0
  %162 = vmatpush1.bf16.msra.mxu0 0
  %163 = vmatprep.subr.bf16.mxu0 0
  %164 = vmatpush1.bf16.msra.mxu0 0
  %165 = vmatprep.subr.bf16.mxu0 0
  %166 = vmatpush1.bf16.msra.mxu0 0
  %167 = vmatprep.subr.bf16.mxu0 0
  %168 = vmatpush1.bf16.msra.mxu0 0
  %169 = vmatprep.subr.bf16.mxu0 0
  %170 = vmatpush1.bf16.msra.mxu0 0
  %171 = vmatprep.subr.bf16.mxu0 0
  %172 = vmatpush1.bf16.msra.mxu0 %v156
  %173 = vmatprep.subr.bf16.mxu0 0
  %174 = vmatpush1.bf16.msra.mxu0 %v155
  %175 = vmatprep.subr.bf16.mxu0 0
  %176 = vmatpush2.bf16.msra.mxu0 0
  %177 = vmatprep.subr.bf16.mxu0 0
  %178 = vmatpush2.bf16.msra.mxu0 0
  %179 = vmatprep.subr.bf16.mxu0 0
  %180 = vmatpush2.bf16.msra.mxu0 0
  %181 = vmatprep.subr.bf16.mxu0 0
  %182 = vmatpush2.bf16.msra.mxu0 0
  %183 = vmatprep.subr.bf16.mxu0 0
  %184 = vmatpush2.bf16.msra.mxu0 0
  %185 = vmatprep.subr.bf16.mxu0 0
  %186 = vmatpush2.bf16.msra.mxu0 0
  %187 = vmatprep.subr.bf16.mxu0 0
  %188 = vmatpush2.bf16.msra.mxu0 0
  %189 = vmatprep.subr.bf16.mxu0 0
  %190 = vmatpush2.bf16.msra.mxu0 0
  %191 = vmatprep.mubr.bf16.mxu0 0
  %192 = vmatmul.mubr.bf16.gmra.mxu0 %v66
  %v193 = vpop.f32.mrf.mxu0
  %v194 = vadd.f32 0.0, %v193
  %v195 = vpop.f32.mrf.mxu0
  %v196 = vpop.f32.mrf.mxu0
  %v197 = vadd.f32 0.0, %v196
  %v198 = vpop.f32.mrf.mxu0
  %199 = vmatprep.mubr.bf16.mxu0 0
  %200 = vmatmul.mubr.bf16.gmra.mxu0 %v69
  %v201 = vpop.f32.mrf.mxu0
  %v202 = vadd.f32 0.0, %v201
  %v203 = vpop.f32.mrf.mxu0
  %v204 = vpop.f32.mrf.mxu0
  %v205 = vadd.f32 0.0, %v204
  %v206 = vpop.f32.mrf.mxu0
  %207 = vmatprep.mubr.bf16.mxu0 0
  %208 = vmatmul.mubr.bf16.gmra.mxu0 %v72
  %v209 = vpop.f32.mrf.mxu0
  %v210 = vadd.f32 0.0, %v209
  %v211 = vpop.f32.mrf.mxu0
  %v212 = vpop.f32.mrf.mxu0
  %v213 = vadd.f32 0.0, %v212
  %v214 = vpop.f32.mrf.mxu0
  %215 = vmatprep.mubr.bf16.mxu0 0
  %216 = vmatmul.mubr.bf16.gmra.mxu0 %v75
  %v217 = vpop.f32.mrf.mxu0
  %v218 = vadd.f32 0.0, %v217
  %v219 = vpop.f32.mrf.mxu0
  %v220 = vpop.f32.mrf.mxu0
  %v221 = vadd.f32 0.0, %v220
  %v222 = vpop.f32.mrf.mxu0
  %223 = vdwg.mxu0
  %vm232 = vcmask 1046528
  %v233 = vrot.slane %v112, 1
  %v234 = vrot.slane %v115, 1
  %v235 = vsel %vm232, %v233, %v234
  %v236 = vrot.slane %v120, 1
  %v237 = vsel %vm232, %v234, %v236
  %v238 = vrot.slane %v123, 1
  %v239 = vsel %vm232, %v236, %v238
  %v240 = vrot.slane %v128, 1
  %v241 = vsel %vm232, %v238, %v240
  %v242 = vrot.slane %v131, 1
  %v243 = vsel %vm232, %v240, %v242
  %v244 = vrot.slane %v136, 1
  %v245 = vsel %vm232, %v242, %v244
  %v246 = vrot.slane %v139, 1
  %v247 = vsel %vm232, %v244, %v246
  %v257 = vsel %vm232, %v246, %v233
  %v262 = vunpack.c.l.b16 %v23
  %v263 = vunpack.c.l.b16 %v24
  %v264 = vunpack.c.l.b16 %v25
  %v265 = vunpack.c.l.b16 %v26
  %v266 = vpack.c.b16 %v263, %v262
  %v267 = vpack.c.b16 %v265, %v264
  %270 = vmatprep.subr.bf16.mxu0 0
  %271 = vmatpush1.bf16.msra.mxu0 0
  %272 = vmatprep.subr.bf16.mxu0 0
  %273 = vmatpush1.bf16.msra.mxu0 0
  %274 = vmatprep.subr.bf16.mxu0 0
  %275 = vmatpush1.bf16.msra.mxu0 0
  %276 = vmatprep.subr.bf16.mxu0 0
  %277 = vmatpush1.bf16.msra.mxu0 0
  %278 = vmatprep.subr.bf16.mxu0 0
  %279 = vmatpush1.bf16.msra.mxu0 0
  %280 = vmatprep.subr.bf16.mxu0 0
  %281 = vmatpush1.bf16.msra.mxu0 0
  %282 = vmatprep.subr.bf16.mxu0 0
  %283 = vmatpush1.bf16.msra.mxu0 %v267
  %284 = vmatprep.subr.bf16.mxu0 0
  %285 = vmatpush1.bf16.msra.mxu0 %v266
  %286 = vmatprep.subr.bf16.mxu0 0
  %287 = vmatpush2.bf16.msra.mxu0 0
  %288 = vmatprep.subr.bf16.mxu0 0
  %289 = vmatpush2.bf16.msra.mxu0 0
  %290 = vmatprep.subr.bf16.mxu0 0
  %291 = vmatpush2.bf16.msra.mxu0 0
  %292 = vmatprep.subr.bf16.mxu0 0
  %293 = vmatpush2.bf16.msra.mxu0 0
  %294 = vmatprep.subr.bf16.mxu0 0
  %295 = vmatpush2.bf16.msra.mxu0 0
  %296 = vmatprep.subr.bf16.mxu0 0
  %297 = vmatpush2.bf16.msra.mxu0 0
  %298 = vmatprep.subr.bf16.mxu0 0
  %299 = vmatpush2.bf16.msra.mxu0 0
  %300 = vmatprep.subr.bf16.mxu0 0
  %301 = vmatpush2.bf16.msra.mxu0 0
  %302 = vmatprep.mubr.bf16.mxu0 0
  %303 = vmatmul.mubr.bf16.gmra.mxu0 %v66
  %v304 = vpop.f32.mrf.mxu0
  %v305 = vadd.f32 %v235, %v304
  %v306 = vpop.f32.mrf.mxu0
  %v307 = vpop.f32.mrf.mxu0
  %v308 = vadd.f32 %v237, %v307
  %v309 = vpop.f32.mrf.mxu0
  %310 = vmatprep.mubr.bf16.mxu0 0
  %311 = vmatmul.mubr.bf16.gmra.mxu0 %v69
  %v312 = vpop.f32.mrf.mxu0
  %v313 = vadd.f32 %v239, %v312
  %v314 = vpop.f32.mrf.mxu0
  %v315 = vpop.f32.mrf.mxu0
  %v316 = vadd.f32 %v241, %v315
  %v317 = vpop.f32.mrf.mxu0
  %318 = vmatprep.mubr.bf16.mxu0 0
  %319 = vmatmul.mubr.bf16.gmra.mxu0 %v72
  %v320 = vpop.f32.mrf.mxu0
  %v321 = vadd.f32 %v243, %v320
  %v322 = vpop.f32.mrf.mxu0
  %v323 = vpop.f32.mrf.mxu0
  %v324 = vadd.f32 %v245, %v323
  %v325 = vpop.f32.mrf.mxu0
  %326 = vmatprep.mubr.bf16.mxu0 0
  %327 = vmatmul.mubr.bf16.gmra.mxu0 %v75
  %v328 = vpop.f32.mrf.mxu0
  %v329 = vadd.f32 %v247, %v328
  %v330 = vpop.f32.mrf.mxu0
  %v331 = vpop.f32.mrf.mxu0
  %v332 = vadd.f32 %v257, %v331
  %v333 = vpop.f32.mrf.mxu0
  %334 = vdwg.mxu0
  %vm343 = vcmask 1045504
  %v344 = vrot.slane %v194, 2
  %v345 = vrot.slane %v197, 2
  %v346 = vsel %vm343, %v344, %v345
  %v347 = vrot.slane %v202, 2
  %v348 = vsel %vm343, %v345, %v347
  %v349 = vrot.slane %v205, 2
  %v350 = vsel %vm343, %v347, %v349
  %v351 = vrot.slane %v210, 2
  %v352 = vsel %vm343, %v349, %v351
  %v353 = vrot.slane %v213, 2
  %v354 = vsel %vm343, %v351, %v353
  %v355 = vrot.slane %v218, 2
  %v356 = vsel %vm343, %v353, %v355
  %v357 = vrot.slane %v221, 2
  %v358 = vsel %vm343, %v355, %v357
  %v368 = vsel %vm343, %v357, %v344
  %v369 = vadd.f32 %v305, %v346
  %v370 = vadd.f32 %v308, %v348
  %v371 = vadd.f32 %v313, %v350
  %v372 = vadd.f32 %v316, %v352
  %v373 = vadd.f32 %v321, %v354
  %v374 = vadd.f32 %v324, %v356
  %v375 = vadd.f32 %v329, %v358
  %v376 = vadd.f32 %v332, %v368
  %v377 = vld [vmem:[%s2] sm:$0x1]
  %v379 = vlaneseq
  %v380 = vshrl.u32 %v379, 7
  %v381 = vsub.s32 0, %v380
  %v382 = vrot.slane %v377, %v381
  %v384 = vadd.f32 %v369, %v382
  %v385 = vadd.f32 %v370, %v382
  %v386 = vadd.f32 %v371, %v382
  %v387 = vadd.f32 %v372, %v382
  %v388 = vadd.f32 %v373, %v382
  %v389 = vadd.f32 %v374, %v382
  %v390 = vadd.f32 %v375, %v382
  %v391 = vadd.f32 %v376, %v382
  %v392 = vmax.f32 %v384, 0.0
  %v393 = vmax.f32 %v385, 0.0
  %v394 = vmax.f32 %v386, 0.0
  %v395 = vmax.f32 %v387, 0.0
  %v396 = vmax.f32 %v388, 0.0
  %v397 = vmax.f32 %v389, 0.0
  %v398 = vmax.f32 %v390, 0.0
  %v399 = vmax.f32 %v391, 0.0
  %v400 = vmul.f32 %v392, %v392
  %v401 = vmul.f32 %v393, %v393
  %v402 = vmul.f32 %v394, %v394
  %v403 = vmul.f32 %v395, %v395
  %v404 = vmul.f32 %v396, %v396
  %v405 = vmul.f32 %v397, %v397
  %v406 = vmul.f32 %v398, %v398
  %v407 = vmul.f32 %v399, %v399
  %v408 = vsel %vm64, %v400, 0.0
  %409 = vadd.xlane.f32.xlu0 %v408
  %v410 = vpop.xlane.xlu0 %409
  %v411 = vsel %vm64, %v401, 0.0
  %412 = vadd.xlane.f32.xlu0 %v411
  %v413 = vpop.xlane.xlu0 %412
  %v414 = vsel %vm64, %v402, 0.0
  %415 = vadd.xlane.f32.xlu0 %v414
  %v416 = vpop.xlane.xlu0 %415
  %v417 = vsel %vm64, %v403, 0.0
  %418 = vadd.xlane.f32.xlu0 %v417
  %v419 = vpop.xlane.xlu0 %418
  %v420 = vsel %vm64, %v404, 0.0
  %421 = vadd.xlane.f32.xlu0 %v420
  %v422 = vpop.xlane.xlu0 %421
  %v423 = vsel %vm64, %v405, 0.0
  %424 = vadd.xlane.f32.xlu0 %v423
  %v425 = vpop.xlane.xlu0 %424
  %v426 = vsel %vm64, %v406, 0.0
  %427 = vadd.xlane.f32.xlu0 %v426
  %v428 = vpop.xlane.xlu0 %427
  %v429 = vsel %vm64, %v407, 0.0
  %430 = vadd.xlane.f32.xlu0 %v429
  %v431 = vpop.xlane.xlu0 %430
  %v432 = vmax.f32 %v410, 1e-24
  %v433 = vmax.f32 %v413, 1e-24
  %v434 = vmax.f32 %v416, 1e-24
  %v435 = vmax.f32 %v419, 1e-24
  %v436 = vmax.f32 %v422, 1e-24
  %v437 = vmax.f32 %v425, 1e-24
  %v438 = vmax.f32 %v428, 1e-24
  %v439 = vmax.f32 %v431, 1e-24
  %v440 = vrsqrt.pop %v432
  %v441 = vrsqrt.pop %v433
  %v442 = vrsqrt.pop %v434
  %v443 = vrsqrt.pop %v435
  %v444 = vrsqrt.pop %v436
  %v445 = vrsqrt.pop %v437
  %v446 = vrsqrt.pop %v438
  %v447 = vrsqrt.pop %v439
  %v448 = vmul.f32 %v392, %v440
  %v449 = vmul.f32 %v393, %v441
  %v450 = vmul.f32 %v394, %v442
  %v451 = vmul.f32 %v395, %v443
  %v452 = vmul.f32 %v396, %v444
  %v453 = vmul.f32 %v397, %v445
  %v454 = vmul.f32 %v398, %v446
  %v455 = vmul.f32 %v399, %v447
  %v456 = vpack.c.bf16 %v449, %v448
  %v457 = vpack.c.bf16 %v451, %v450
  %v458 = vpack.c.bf16 %v453, %v452
  %v459 = vpack.c.bf16 %v455, %v454
  %v464 = vunpack.c.l.b16 %v456
  %v465 = vunpack.c.h.b16 %v456
  %v466 = vunpack.c.l.b16 %v457
  %v467 = vunpack.c.h.b16 %v457
  %v468 = vunpack.c.l.b16 %v458
  %v469 = vunpack.c.h.b16 %v458
  %v470 = vunpack.c.l.b16 %v459
  %v471 = vunpack.c.h.b16 %v459
  %v472 = vpack.c.b16 %v464, %v464
  %v473 = vpack.c.b16 %v465, %v465
  %v474 = vpack.c.b16 %v466, %v466
  %v475 = vpack.c.b16 %v467, %v467
  %v476 = vpack.c.b16 %v468, %v468
  %v477 = vpack.c.b16 %v469, %v469
  %v478 = vpack.c.b16 %v470, %v470
  %v479 = vpack.c.b16 %v471, %v471
  %vm488 = vcmask 257024
  %489 = vst.msk [vmem:[%s3] sm:$0xf] %vm488, %v472
  %490 = vst.msk [vmem:[%s3 + $0x4] sm:$0xf] %vm488, %v473
  %491 = vst.msk [vmem:[%s3 + $0x8] sm:$0xf] %vm488, %v474
  %492 = vst.msk [vmem:[%s3 + $0xc] sm:$0xf] %vm488, %v475
  %493 = vst.msk [vmem:[%s3 + $0x10] sm:$0xf] %vm488, %v476
  %494 = vst.msk [vmem:[%s3 + $0x14] sm:$0xf] %vm488, %v477
  %495 = vst.msk [vmem:[%s3 + $0x18] sm:$0xf] %vm488, %v478
  %496 = vst.msk [vmem:[%s3 + $0x1c] sm:$0xf] %vm488, %v479
  // Predicated region
  $region14: #{tpu_custom_call.1} parent=0 // pred_check
    _
  $region15: #{tpu_custom_call.1} parent=0 // pred_check_branch
    %498 = sbr.rel (0) target = $region17
  $region16: #{tpu_custom_call.1} parent=0 // pred_region
    _
  $region17: #{tpu_custom_call.1} parent=0 // pred_fallthru
    _
  // Predicated region
  $region18: #{tpu_custom_call.1} parent=0 // pred_check
    _
  $region19: #{tpu_custom_call.1} parent=0 // pred_check_branch
    %500 = sbr.rel (0) target = $region21
  $region20: #{tpu_custom_call.1} parent=0 // pred_region
    _
  $region21: #{tpu_custom_call.1} parent=0 // pred_fallthru
    _

</llo_original>
